<compile_context>
chip_gen: v7x
topology: tpu7x:2x2x1
jax: 0.10.0
libtpu: 0.0.40
codegen_flags: <defaults>
</compile_context>

<pallas_src>
import jax
import jax.numpy as jnp
from jax.experimental import pallas as pl
from jax.experimental.pallas import tpu as pltpu


def _cdiv(a, b):
    return -(-a // b)


def _round_up(n, m):
    return ((n + m - 1) // m) * m


def _pad2d(a, rows, cols, dtype):
    """Zero-pad a 2-D array to (rows, cols) and cast to dtype."""
    a = a.astype(dtype)
    if a.shape == (rows, cols):
        return a
    return jnp.zeros((rows, cols), dtype).at[: a.shape[0], : a.shape[1]].set(a)


def _vmem_budget():
    """Generation-dependent scoped-VMEM ceiling and default batch-tile size."""
    phys = None
    try:
        phys = int(pltpu.get_tpu_info().vmem_capacity_bytes)
    except Exception:
        phys = None
    if phys is not None and phys >= 100 * 1024 * 1024:
        # v5e / v6e: 128 MiB physical VMEM -> larger tiles, generous limit.
        return 96 * 1024 * 1024, 1024
    # v7x (64 MiB physical) or unknown: conservative.
    return 48 * 1024 * 1024, 512


def _resident_spec(block_shape, index_map):
    """BlockSpec for a block whose index never changes across the grid: a
    single VMEM buffer suffices (saves ~|W1|+|W2| of VMEM vs. default
    double-buffering)."""
    try:
        return pl.BlockSpec(block_shape, index_map, pipeline_mode=pl.Buffered(1))
    except TypeError:  # older BlockSpec signature without pipeline_mode
        return pl.BlockSpec(block_shape, index_map)


# --------------------------------------------------------------------------
# Phase 1: fc1 matmul per batch tile + streaming BN statistics accumulation.
#   grid = (n_split "parallel", nb_inner "arbitrary"); each core keeps its own
#   resident (8, Hp) partial-sum accumulators (row 0 of each block is used).
# --------------------------------------------------------------------------
def _fc1_stats_kernel(x_ref, w1_ref, h_ref, s1_ref, s2_ref):
    # bf16 operands, f32 accumulation on the MXU.
    h = jnp.dot(x_ref[...], w1_ref[...], preferred_element_type=jnp.float32)
    # fc1 bias intentionally omitted: it is cancelled exactly by the
    # training-mode BatchNorm mean subtraction (and padded batch rows must
    # contribute 0 to the statistics).
    h_ref[...] = h.astype(h_ref.dtype)  # bf16 store: halves the h round-trip

    @pl.when(pl.program_id(1) == 0)
    def _():
        s1_ref[...] = jnp.zeros_like(s1_ref)
        s2_ref[...] = jnp.zeros_like(s2_ref)

    # Stats are taken from the f32 matmul result (before the bf16 cast); the
    # (1, Hp) row sums are broadcast over the 8 sublanes of the accumulator
    # block (lane-dense, (8,128)-rule-compliant); row 0 is read back outside.
    s1_ref[...] += jnp.broadcast_to(
        jnp.sum(h, axis=0, keepdims=True), s1_ref.shape)
    s2_ref[...] += jnp.broadcast_to(
        jnp.sum(h * h, axis=0, keepdims=True), s2_ref.shape)


# --------------------------------------------------------------------------
# Phase 2: folded BN (scale/shift) + ReLU + fc2 per batch tile.
#   grid axis = batch tiles, "parallel" (shards across TCs on v7x).
# --------------------------------------------------------------------------
def _bn_relu_fc2_kernel(h_ref, scale_ref, shift_ref, w2_ref, b2_ref, o_ref):
    h_act = jnp.maximum(
        h_ref[...].astype(jnp.float32) * scale_ref[...] + shift_ref[...], 0.0)
    o_ref[...] = (
        jnp.dot(h_act.astype(w2_ref.dtype), w2_ref[...],
                preferred_element_type=jnp.float32)
        + b2_ref[...]
    ).astype(o_ref.dtype)


def predictor_forward(x, w1, b1, gamma, beta, w2, b2, *, eps=1e-5,
                      block_b=None, compute_dtype=jnp.bfloat16):
    """SimSiam Predictor forward.

    x: (B, D) f32.  w1: (H, D), b1: (H,), gamma/beta: (H,), w2: (D, H),
    b2: (D,)  with H = D // 4 (PyTorch layouts).  Returns (B, D) f32.
    """
    del b1  # cancelled exactly by training-mode BatchNorm (see kernel note).

    B, D = x.shape
    H = w1.shape[0]
    f32 = jnp.float32
    cd = jnp.dtype(compute_dtype).itemsize

    vmem_limit, default_block_b = _vmem_budget()
    if block_b is None:
        block_b = default_block_b

    # Lane-dense padded feature dims.  Small heads are padded to 256 so the
    # 256-wide v6e/v7x MXU columns / phase-2 contraction stay full.
    Dp = _round_up(D, 128)
    Hp = _round_up(H, 256) if H < 256 else _round_up(H, 128)

    # Batch tiling that minimizes padded rows: pick the tile count first, then
    # the smallest sublane-aligned tile covering B.  n_split=2 gives per-core
    # partial BN stats (uses both v7x TensorCores in phase 1).
    nb = _cdiv(B, block_b)
    n_split = 2 if nb >= 2 else 1
    nb = _round_up(nb, n_split)
    tb = _round_up(_cdiv(B, nb), 8)
    Bp = nb * tb
    nb_inner = nb // n_split

    # Zero padding is exact: padded x rows / w1 cols / gamma / beta / w2 rows
    # are all zero, so padded lanes carry zeros end-to-end and padded batch
    # rows contribute nothing to the BN statistics.
    x_p = _pad2d(x, Bp, Dp, compute_dtype)
    w1t_p = _pad2d(w1.T, Dp, Hp, compute_dtype)            # (D, H) -> (Dp, Hp)
    w2t_p = _pad2d(w2.T, Hp, Dp, compute_dtype)            # (H, D) -> (Hp, Dp)
    gamma_p = _pad2d(gamma.reshape(1, -1), 1, Hp, f32)
    beta_p = _pad2d(beta.reshape(1, -1), 1, Hp, f32)
    b2_p = _pad2d(b2.reshape(1, -1), 1, Dp, f32)

    # ---------------- Phase 1: fc1 + BN statistics ----------------
    h, s1, s2 = pl.pallas_call(
        _fc1_stats_kernel,
        out_shape=(
            jax.ShapeDtypeStruct((Bp, Hp), compute_dtype),   # pre-BN h (bf16)
            jax.ShapeDtypeStruct((n_split * 8, Hp), f32),    # per-core sum
            jax.ShapeDtypeStruct((n_split * 8, Hp), f32),    # per-core sumsq
        ),
        grid_spec=pltpu.PrefetchScalarGridSpec(
            num_scalar_prefetch=0,
            grid=(n_split, nb_inner),
            in_specs=[
                pl.BlockSpec((tb, Dp), lambda c, i: (c * nb_inner + i, 0)),
                _resident_spec((Dp, Hp), lambda c, i: (0, 0)),   # W1^T resident
            ],
            out_specs=(
                pl.BlockSpec((tb, Hp), lambda c, i: (c * nb_inner + i, 0)),
                pl.BlockSpec((8, Hp), lambda c, i: (c, 0)),      # accumulator
                pl.BlockSpec((8, Hp), lambda c, i: (c, 0)),      # accumulator
            ),
        ),
        compiler_params=pltpu.CompilerParams(
            dimension_semantics=("parallel", "arbitrary"),
            vmem_limit_bytes=vmem_limit,
        ),
        cost_estimate=pl.CostEstimate(
            flops=2 * Bp * Dp * Hp + 3 * Bp * Hp,
            transcendentals=0,
            bytes_accessed=Bp * Dp * cd + Dp * Hp * cd + Bp * Hp * cd
            + 2 * n_split * 8 * Hp * 4,
        ),
    )(x_p, w1t_p)

    # Fold BN into a single scale/shift on tiny (1, Hp) vectors (plain JAX,
    # fused by XLA around the two pallas_calls).  Combine the per-core partial
    # sums (row 0 of each 8-row block) and divide by the *real* batch size;
    # padded rows contributed exactly zero to the sums.
    s1_tot = s1[0::8].sum(axis=0, keepdims=True)
    s2_tot = s2[0::8].sum(axis=0, keepdims=True)
    inv_n = 1.0 / B
    mean = s1_tot * inv_n
    var = jnp.maximum(s2_tot * inv_n - mean * mean, 0.0)    # biased variance
    scale = gamma_p * jax.lax.rsqrt(var + eps)
    shift = beta_p - mean * scale

    # ---------------- Phase 2: folded BN + ReLU + fc2 ----------------
    out_p = pl.pallas_call(
        _bn_relu_fc2_kernel,
        out_shape=jax.ShapeDtypeStruct((Bp, Dp), f32),
        grid_spec=pltpu.PrefetchScalarGridSpec(
            num_scalar_prefetch=0,
            grid=(nb,),
            in_specs=[
                pl.BlockSpec((tb, Hp), lambda i: (i, 0)),        # h tile (bf16)
                _resident_spec((1, Hp), lambda i: (0, 0)),       # scale
                _resident_spec((1, Hp), lambda i: (0, 0)),       # shift
                _resident_spec((Hp, Dp), lambda i: (0, 0)),      # W2^T resident
                _resident_spec((1, Dp), lambda i: (0, 0)),       # b2
            ],
            out_specs=pl.BlockSpec((tb, Dp), lambda i: (i, 0)),
        ),
        compiler_params=pltpu.CompilerParams(
            dimension_semantics=("parallel",),   # shards across v7x's 2 TCs
            vmem_limit_bytes=vmem_limit,
        ),
        cost_estimate=pl.CostEstimate(
            flops=2 * Bp * Hp * Dp + 3 * Bp * Hp + Bp * Dp,
            transcendentals=0,
            bytes_accessed=Bp * Hp * cd + 2 * Hp * 4 + Hp * Dp * cd
            + Dp * 4 + Bp * Dp * 4,
        ),
    )(h, scale, shift, w2t_p, b2_p)

    return out_p[:B, :D]


def init_params(key, latent_dim):
    """Deterministic PyTorch-style (Kaiming-uniform-ish) init."""
    hidden = latent_dim // 4
    k1, k2, k3, k4 = jax.random.split(key, 4)
    bound1 = 1.0 / jnp.sqrt(latent_dim)
    bound2 = 1.0 / jnp.sqrt(hidden)
    w1 = jax.random.uniform(k1, (hidden, latent_dim), jnp.float32, -bound1, bound1)
    b1 = jax.random.uniform(k2, (hidden,), jnp.float32, -bound1, bound1)
    w2 = jax.random.uniform(k3, (latent_dim, hidden), jnp.float32, -bound2, bound2)
    b2 = jax.random.uniform(k4, (latent_dim,), jnp.float32, -bound2, bound2)
    gamma = jnp.ones((hidden,), jnp.float32)   # BatchNorm1d weight init
    beta = jnp.zeros((hidden,), jnp.float32)   # BatchNorm1d bias init
    return w1, b1, gamma, beta, w2, b2


def reference_forward(x, w1, b1, gamma, beta, w2, b2, eps=1e-5,
                      compute_dtype=jnp.bfloat16):
    """PyTorch-semantics reference (training-mode BN, biased variance, keeps
    b1, two-pass variance, f32 h) with the same matmul precision policy as the
    kernel (bf16 operands, f32 accumulation)."""
    h = jnp.dot(x.astype(compute_dtype), w1.T.astype(compute_dtype),
                preferred_element_type=jnp.float32) + b1
    mean = h.mean(axis=0, keepdims=True)
    var = ((h - mean) ** 2).mean(axis=0, keepdims=True)
    h = (h - mean) * jax.lax.rsqrt(var + eps) * gamma + beta
    h = jnp.maximum(h, 0.0)
    return jnp.dot(h.astype(compute_dtype), w2.T.astype(compute_dtype),
                   preferred_element_type=jnp.float32) + b2


if __name__ == "__main__":
    latent_dim = 32   # -> hidden = latent_dim // 4 = 8 (padded to 256 lanes)
    batch = 16

    key = jax.random.PRNGKey(0)
    kx, kp = jax.random.split(key)
    x = jax.random.normal(kx, (batch, latent_dim), jnp.float32)
    w1, b1, gamma, beta, w2, b2 = init_params(kp, latent_dim)

    out = jax.jit(predictor_forward)(x, w1, b1, gamma, beta, w2, b2)
    out = jax.block_until_ready(out)

    ref = reference_forward(x, w1, b1, gamma, beta, w2, b2)
    assert out.shape == (batch, latent_dim)
    max_diff = float(jnp.max(jnp.abs(out - ref)))
    # Tolerance covers the bf16 storage of the pre-BN intermediate h (kernel)
    # vs. f32 h (reference) on top of the shared bf16 matmul policy.
    assert jnp.allclose(out, ref, atol=1e-2, rtol=1e-2), (
        f"mismatch vs reference, max abs diff = {max_diff}")

    print("KERNEL_OK")
</pallas_src>

<mosaic_0001>
module attributes {stable_mosaic.version = 11 : i64} {
  func.func @_fc1_stats_kernel(%arg0: i32, %arg1: i32, %arg2: memref<16x128xbf16, #tpu.memory_space<vmem>>, %arg3: memref<128x256xbf16, #tpu.memory_space<vmem>>, %arg4: memref<16x256xbf16, #tpu.memory_space<vmem>>, %arg5: memref<8x256xf32, #tpu.memory_space<vmem>>, %arg6: memref<8x256xf32, #tpu.memory_space<vmem>>) attributes {dimension_semantics = [#tpu.dimension_semantics<parallel>, #tpu.dimension_semantics<arbitrary>], iteration_bounds = array<i64: 1, 1>, scalar_prefetch = 0 : i64, scratch_operands = 0 : i64, tpu.core_type = #tpu.core_type<tc>, window_params = [{transform_indices = @transform_0, window_bounds = array<i64: 16, 128>}, {pipeline_mode = #tpu.pipeline_mode<synchronous>, transform_indices = @transform_1, window_bounds = array<i64: 128, 256>}, {transform_indices = @transform_2, window_bounds = array<i64: 16, 256>}, {transform_indices = @transform_3, window_bounds = array<i64: 8, 256>}, {transform_indices = @transform_4, window_bounds = array<i64: 8, 256>}]} {
    %c0 = arith.constant 0 : index
    %c0_0 = arith.constant 0 : index
    %0 = vector.load %arg2[%c0, %c0_0] : memref<16x128xbf16, #tpu.memory_space<vmem>>, vector<16x128xbf16>
    %c0_1 = arith.constant 0 : index
    %c0_2 = arith.constant 0 : index
    %1 = vector.load %arg3[%c0_1, %c0_2] : memref<128x256xbf16, #tpu.memory_space<vmem>>, vector<128x256xbf16>
    %cst = arith.constant dense<0.000000e+00> : vector<16x256xf32>
    %2 = tpu.matmul %0, %1, %cst {dimension_numbers = #tpu.dot_dimension_numbers<[1], [0], [0], [1], [0, 0, 1, 1], [], []>} : vector<16x128xbf16>, vector<128x256xbf16>, vector<16x256xf32> -> vector<16x256xf32>
    %3 = arith.truncf %2 : vector<16x256xf32> to vector<16x256xbf16>
    %c0_3 = arith.constant 0 : index
    %c0_4 = arith.constant 0 : index
    %4 = vector.load %arg4[%c0_3, %c0_4] : memref<16x256xbf16, #tpu.memory_space<vmem>>, vector<16x256xbf16>
    tpu.vector_store %arg4[%c0_3, %c0_4], %3 {strides = array<i32>} : memref<16x256xbf16, #tpu.memory_space<vmem>>, vector<16x256xbf16>,
    %c0_i32 = arith.constant 0 : i32
    %5 = arith.cmpi eq, %arg1, %c0_i32 : i32
    %6 = arith.extui %5 : i1 to i32
    %c0_i32_5 = arith.constant 0 : i32
    %7 = arith.cmpi ne, %6, %c0_i32_5 : i32
    scf.if %7 {
      %cst_16 = arith.constant 0.000000e+00 : f32
      %23 = vector.broadcast %cst_16 : f32 to vector<8x256xf32>
      %c0_17 = arith.constant 0 : index
      %c0_18 = arith.constant 0 : index
      %24 = vector.load %arg5[%c0_17, %c0_18] : memref<8x256xf32, #tpu.memory_space<vmem>>, vector<8x256xf32>
      tpu.vector_store %arg5[%c0_17, %c0_18], %23 {strides = array<i32>} : memref<8x256xf32, #tpu.memory_space<vmem>>, vector<8x256xf32>,
      %cst_19 = arith.constant 0.000000e+00 : f32
      %25 = vector.broadcast %cst_19 : f32 to vector<8x256xf32>
      %c0_20 = arith.constant 0 : index
      %c0_21 = arith.constant 0 : index
      %26 = vector.load %arg6[%c0_20, %c0_21] : memref<8x256xf32, #tpu.memory_space<vmem>>, vector<8x256xf32>
      tpu.vector_store %arg6[%c0_20, %c0_21], %25 {strides = array<i32>} : memref<8x256xf32, #tpu.memory_space<vmem>>, vector<8x256xf32>,
    } else {
    }
    %c0_6 = arith.constant 0 : index
    %c0_7 = arith.constant 0 : index
    %8 = vector.load %arg5[%c0_6, %c0_7] : memref<8x256xf32, #tpu.memory_space<vmem>>, vector<8x256xf32>
    %cst_8 = arith.constant dense<0.000000e+00> : vector<256xf32>
    %9 = vector.multi_reduction <add>, %2, %cst_8 [0] : vector<16x256xf32> to vector<256xf32>
    %10 = vector.shape_cast %9 : vector<256xf32> to vector<1x256xf32>
    %11 = vector.shape_cast %10 : vector<1x256xf32> to vector<1x256xf32>
    %12 = vector.broadcast %11 : vector<1x256xf32> to vector<8x256xf32>
    %13 = arith.addf %8, %12 : vector<8x256xf32>
    %c0_9 = arith.constant 0 : index
    %c0_10 = arith.constant 0 : index
    %14 = vector.load %arg5[%c0_9, %c0_10] : memref<8x256xf32, #tpu.memory_space<vmem>>, vector<8x256xf32>
    tpu.vector_store %arg5[%c0_9, %c0_10], %13 {strides = array<i32>} : memref<8x256xf32, #tpu.memory_space<vmem>>, vector<8x256xf32>,
    %c0_11 = arith.constant 0 : index
    %c0_12 = arith.constant 0 : index
    %15 = vector.load %arg6[%c0_11, %c0_12] : memref<8x256xf32, #tpu.memory_space<vmem>>, vector<8x256xf32>
    %16 = arith.mulf %2, %2 : vector<16x256xf32>
    %cst_13 = arith.constant dense<0.000000e+00> : vector<256xf32>
    %17 = vector.multi_reduction <add>, %16, %cst_13 [0] : vector<16x256xf32> to vector<256xf32>
    %18 = vector.shape_cast %17 : vector<256xf32> to vector<1x256xf32>
    %19 = vector.shape_cast %18 : vector<1x256xf32> to vector<1x256xf32>
    %20 = vector.broadcast %19 : vector<1x256xf32> to vector<8x256xf32>
    %21 = arith.addf %15, %20 : vector<8x256xf32>
    %c0_14 = arith.constant 0 : index
    %c0_15 = arith.constant 0 : index
    %22 = vector.load %arg6[%c0_14, %c0_15] : memref<8x256xf32, #tpu.memory_space<vmem>>, vector<8x256xf32>
    tpu.vector_store %arg6[%c0_14, %c0_15], %21 {strides = array<i32>} : memref<8x256xf32, #tpu.memory_space<vmem>>, vector<8x256xf32>,
    return
  }
  func.func @transform_0(%arg0: i32, %arg1: i32) -> (i32, i32) {
    %c1_i32 = arith.constant 1 : i32
    %0 = arith.muli %arg0, %c1_i32 : i32
    %1 = arith.addi %0, %arg1 : i32
    %c0_i32 = arith.constant 0 : i32
    %c0_i32_0 = arith.constant 0 : i32
    return %1, %c0_i32 : i32, i32
  }
  func.func @transform_1(%arg0: i32, %arg1: i32) -> (i32, i32) {
    %c0_i32 = arith.constant 0 : i32
    %c0_i32_0 = arith.constant 0 : i32
    %c0_i32_1 = arith.constant 0 : i32
    return %c0_i32, %c0_i32_0 : i32, i32
  }
  func.func @transform_2(%arg0: i32, %arg1: i32) -> (i32, i32) {
    %c1_i32 = arith.constant 1 : i32
    %0 = arith.muli %arg0, %c1_i32 : i32
    %1 = arith.addi %0, %arg1 : i32
    %c0_i32 = arith.constant 0 : i32
    %c0_i32_0 = arith.constant 0 : i32
    return %1, %c0_i32 : i32, i32
  }
  func.func @transform_3(%arg0: i32, %arg1: i32) -> (i32, i32) {
    %c0_i32 = arith.constant 0 : i32
    %c0_i32_0 = arith.constant 0 : i32
    return %arg0, %c0_i32 : i32, i32
  }
  func.func @transform_4(%arg0: i32, %arg1: i32) -> (i32, i32) {
    %c0_i32 = arith.constant 0 : i32
    %c0_i32_0 = arith.constant 0 : i32
    return %arg0, %c0_i32 : i32, i32
  }
}

module attributes {stable_mosaic.version = 11 : i64} {
  func.func @_bn_relu_fc2_kernel(%arg0: i32, %arg1: memref<16x256xbf16, #tpu.memory_space<vmem>>, %arg2: memref<1x256xf32, #tpu.memory_space<vmem>>, %arg3: memref<1x256xf32, #tpu.memory_space<vmem>>, %arg4: memref<256x128xbf16, #tpu.memory_space<vmem>>, %arg5: memref<1x128xf32, #tpu.memory_space<vmem>>, %arg6: memref<16x128xf32, #tpu.memory_space<vmem>>) attributes {dimension_semantics = [#tpu.dimension_semantics<parallel>], iteration_bounds = array<i64: 1>, scalar_prefetch = 0 : i64, scratch_operands = 0 : i64, tpu.core_type = #tpu.core_type<tc>, window_params = [{transform_indices = @transform_0, window_bounds = array<i64: 16, 256>}, {pipeline_mode = #tpu.pipeline_mode<synchronous>, transform_indices = @transform_1, window_bounds = array<i64: 1, 256>}, {pipeline_mode = #tpu.pipeline_mode<synchronous>, transform_indices = @transform_2, window_bounds = array<i64: 1, 256>}, {pipeline_mode = #tpu.pipeline_mode<synchronous>, transform_indices = @transform_3, window_bounds = array<i64: 256, 128>}, {pipeline_mode = #tpu.pipeline_mode<synchronous>, transform_indices = @transform_4, window_bounds = array<i64: 1, 128>}, {transform_indices = @transform_5, window_bounds = array<i64: 16, 128>}]} {
    %c0 = arith.constant 0 : index
    %c0_0 = arith.constant 0 : index
    %0 = vector.load %arg1[%c0, %c0_0] : memref<16x256xbf16, #tpu.memory_space<vmem>>, vector<16x256xbf16>
    %1 = arith.extf %0 : vector<16x256xbf16> to vector<16x256xf32>
    %c0_1 = arith.constant 0 : index
    %c0_2 = arith.constant 0 : index
    %2 = vector.load %arg2[%c0_1, %c0_2] : memref<1x256xf32, #tpu.memory_space<vmem>>, vector<1x256xf32>
    %3 = vector.broadcast %2 : vector<1x256xf32> to vector<16x256xf32>
    %4 = arith.mulf %1, %3 : vector<16x256xf32>
    %c0_3 = arith.constant 0 : index
    %c0_4 = arith.constant 0 : index
    %5 = vector.load %arg3[%c0_3, %c0_4] : memref<1x256xf32, #tpu.memory_space<vmem>>, vector<1x256xf32>
    %6 = vector.broadcast %5 : vector<1x256xf32> to vector<16x256xf32>
    %7 = arith.addf %4, %6 : vector<16x256xf32>
    %cst = arith.constant 0.000000e+00 : f32
    %8 = vector.broadcast %cst : f32 to vector<16x256xf32>
    %9 = arith.maximumf %7, %8 : vector<16x256xf32>
    %10 = arith.truncf %9 : vector<16x256xf32> to vector<16x256xbf16>
    %c0_5 = arith.constant 0 : index
    %c0_6 = arith.constant 0 : index
    %11 = vector.load %arg4[%c0_5, %c0_6] : memref<256x128xbf16, #tpu.memory_space<vmem>>, vector<256x128xbf16>
    %cst_7 = arith.constant dense<0.000000e+00> : vector<16x128xf32>
    %12 = tpu.matmul %10, %11, %cst_7 {dimension_numbers = #tpu.dot_dimension_numbers<[1], [0], [0], [1], [0, 0, 1, 1], [], []>} : vector<16x256xbf16>, vector<256x128xbf16>, vector<16x128xf32> -> vector<16x128xf32>
    %c0_8 = arith.constant 0 : index
    %c0_9 = arith.constant 0 : index
    %13 = vector.load %arg5[%c0_8, %c0_9] : memref<1x128xf32, #tpu.memory_space<vmem>>, vector<1x128xf32>
    %14 = vector.broadcast %13 : vector<1x128xf32> to vector<16x128xf32>
    %15 = arith.addf %12, %14 : vector<16x128xf32>
    %c0_10 = arith.constant 0 : index
    %c0_11 = arith.constant 0 : index
    %16 = vector.load %arg6[%c0_10, %c0_11] : memref<16x128xf32, #tpu.memory_space<vmem>>, vector<16x128xf32>
    tpu.vector_store %arg6[%c0_10, %c0_11], %15 {strides = array<i32>} : memref<16x128xf32, #tpu.memory_space<vmem>>, vector<16x128xf32>,
    return
  }
  func.func @transform_0(%arg0: i32) -> (i32, i32) {
    %c0_i32 = arith.constant 0 : i32
    %c0_i32_0 = arith.constant 0 : i32
    return %arg0, %c0_i32 : i32, i32
  }
  func.func @transform_1(%arg0: i32) -> (i32, i32) {
    %c0_i32 = arith.constant 0 : i32
    %c0_i32_0 = arith.constant 0 : i32
    %c0_i32_1 = arith.constant 0 : i32
    return %c0_i32, %c0_i32_0 : i32, i32
  }
  func.func @transform_2(%arg0: i32) -> (i32, i32) {
    %c0_i32 = arith.constant 0 : i32
    %c0_i32_0 = arith.constant 0 : i32
    %c0_i32_1 = arith.constant 0 : i32
    return %c0_i32, %c0_i32_0 : i32, i32
  }
  func.func @transform_3(%arg0: i32) -> (i32, i32) {
    %c0_i32 = arith.constant 0 : i32
    %c0_i32_0 = arith.constant 0 : i32
    %c0_i32_1 = arith.constant 0 : i32
    return %c0_i32, %c0_i32_0 : i32, i32
  }
  func.func @transform_4(%arg0: i32) -> (i32, i32) {
    %c0_i32 = arith.constant 0 : i32
    %c0_i32_0 = arith.constant 0 : i32
    %c0_i32_1 = arith.constant 0 : i32
    return %c0_i32, %c0_i32_0 : i32, i32
  }
  func.func @transform_5(%arg0: i32) -> (i32, i32) {
    %c0_i32 = arith.constant 0 : i32
    %c0_i32_0 = arith.constant 0 : i32
    return %arg0, %c0_i32 : i32, i32
  }
}

</mosaic_0001>

<llo_original>
// kernel: predictor_forward.2
$region0: #{predictor_forward.2}
  #allocation0 [shape = 'u32[]', space=smem, size = 0x4, offset = 0x4, fixed_abs, tag = 'smem constant byte address 0x4 - core index']
  #allocation1 [shape = 'u32[144,128]{1,0:T(1,128)}', space=vmem, size = 0x12000, scoped, tag = 'internal scratch']
  %s0 = inlined_call_operand.vmem [shape: bf16[16,128], index: 0, kind: input, shape index: {}]
  %s1 = inlined_call_operand.vmem [shape: bf16[128,256], index: 1, kind: input, shape index: {}]
  %s2 = inlined_call_operand.vmem [shape: bf16[16,256], index: 2, kind: output, shape index: {0}]
  %s3 = inlined_call_operand.vmem [shape: f32[8,256], index: 3, kind: output, shape index: {1}]
  %s4 = inlined_call_operand.vmem [shape: f32[8,256], index: 4, kind: output, shape index: {2}]
  %5 = xla_tuple %s2, %s3, %s4
  %s6 = sld [smem:[#allocation0]]
  $region38: #{predictor_forward.2} parent=0
    _
  %s8 = ssub.s32 1, %s6
  %s9 = scalar_select 0, %s8, %s6
  // Predicated region
  $region2: #{predictor_forward.2} parent=0 // pred_check
    _
  $region3: #{predictor_forward.2} parent=0 // pred_check_branch
    %11 = sbr.rel (0) target = $region5
  $region4: #{predictor_forward.2} parent=0 // pred_region
    %s12 = sadd.s32 0, 0
    %s13 = smul.u32 2, %s12
    %p14 = scmp.lt.s32.totalorder %s13, 1
    %s15 = scalar_select %p14, %s13, 1
    %s16 = smul.addr %s15, 4
    %s17 = scalar_lea.vmem %s0, %s16
    %s18 = sadd.s32 0, 0
    %s19 = smul.u32 2, %s18
  $region5: #{predictor_forward.2} parent=0 // pred_fallthru
    _
  // Predicated region
  $region6: #{predictor_forward.2} parent=0 // pred_check
    _
  $region7: #{predictor_forward.2} parent=0 // pred_check_branch
    %21 = sbr.rel (0) target = $region9
  $region8: #{predictor_forward.2} parent=0 // pred_region
    _
  $region9: #{predictor_forward.2} parent=0 // pred_fallthru
    _
  %s22 = sadd.s32 0, 0
  %s23 = smul.u32 2, %s22
  %p24 = scmp.lt.s32.totalorder %s23, 1
  %s25 = scalar_select %p24, %s23, 1
  %s26 = smul.addr %s25, 4
  %s27 = scalar_lea.vmem %s0, %s26
  %s28 = sadd.s32 0, 0
  %s29 = smul.u32 2, %s28
  %p30 = scmp.lt.s32.totalorder %s29, 1
  %s31 = scalar_select %p30, %s29, 1
  %s32 = smul.addr %s31, 2
  %s33 = smul.addr %s32, 4
  %s34 = scalar_lea.vmem %s2, %s33
  %s35 = sadd.s32 0, 0
  %s36 = smul.u32 2, %s35
  %p37 = scmp.lt.s32.totalorder %s36, 1
  %s38 = scalar_select %p37, %s36, 1
  %s39 = smul.addr %s38, 4
  %s40 = scalar_lea.vmem %s0, %s39
  %s41 = sadd.s32 0, 0
  %s42 = smul.u32 2, %s41
  %s43 = sadd.s32 0, 0
  %s44 = smul.u32 2, %s43
  %p45 = scmp.lt.s32.totalorder %s44, 1
  %s46 = scalar_select %p45, %s44, 1
  %s47 = smul.addr %s46, 2
  %s48 = smul.addr %s47, 4
  %s49 = scalar_lea.vmem %s2, %s48
  %s50 = sadd.s32 0, 0
  %s51 = smul.u32 2, %s50
  %v53 = vld [vmem:[%s40] sm:$0xf]
  %v54 = vld [vmem:[%s40 + $0x4] sm:$0xf]
  %v55 = vld [vmem:[%s1] sm:$0xff]
  %v56 = vld [vmem:[%s1 + $0x8] sm:$0xff]
  %v57 = vld [vmem:[%s1 + $0x10] sm:$0xff]
  %v58 = vld [vmem:[%s1 + $0x18] sm:$0xff]
  %v59 = vld [vmem:[%s1 + $0x20] sm:$0xff]
  %v60 = vld [vmem:[%s1 + $0x28] sm:$0xff]
  %v61 = vld [vmem:[%s1 + $0x30] sm:$0xff]
  %v62 = vld [vmem:[%s1 + $0x38] sm:$0xff]
  %v63 = vld [vmem:[%s1 + $0x40] sm:$0xff]
  %v64 = vld [vmem:[%s1 + $0x48] sm:$0xff]
  %v65 = vld [vmem:[%s1 + $0x50] sm:$0xff]
  %v66 = vld [vmem:[%s1 + $0x58] sm:$0xff]
  %v67 = vld [vmem:[%s1 + $0x60] sm:$0xff]
  %v68 = vld [vmem:[%s1 + $0x68] sm:$0xff]
  %v69 = vld [vmem:[%s1 + $0x70] sm:$0xff]
  %v70 = vld [vmem:[%s1 + $0x78] sm:$0xff]
  %v73 = vunpack.c.l.b16 %v53
  %v74 = vunpack.c.l.b16 %v54
  %v75 = vpack.c.b16 %v74, %v73
  %v93 = vunpack.c.l.b16 %v55
  %v94 = vunpack.c.h.b16 %v55
  %v95 = vunpack.c.l.b16 %v56
  %v96 = vunpack.c.h.b16 %v56
  %v97 = vunpack.c.l.b16 %v57
  %v98 = vunpack.c.h.b16 %v57
  %v99 = vunpack.c.l.b16 %v58
  %v100 = vunpack.c.h.b16 %v58
  %v101 = vunpack.c.l.b16 %v59
  %v102 = vunpack.c.h.b16 %v59
  %v103 = vunpack.c.l.b16 %v60
  %v104 = vunpack.c.h.b16 %v60
  %v105 = vunpack.c.l.b16 %v61
  %v106 = vunpack.c.h.b16 %v61
  %v107 = vunpack.c.l.b16 %v62
  %v108 = vunpack.c.h.b16 %v62
  %v109 = vunpack.c.l.b16 %v63
  %v110 = vunpack.c.h.b16 %v63
  %v111 = vunpack.c.l.b16 %v64
  %v112 = vunpack.c.h.b16 %v64
  %v113 = vunpack.c.l.b16 %v65
  %v114 = vunpack.c.h.b16 %v65
  %v115 = vunpack.c.l.b16 %v66
  %v116 = vunpack.c.h.b16 %v66
  %v117 = vunpack.c.l.b16 %v67
  %v118 = vunpack.c.h.b16 %v67
  %v119 = vunpack.c.l.b16 %v68
  %v120 = vunpack.c.h.b16 %v68
  %v121 = vunpack.c.l.b16 %v69
  %v122 = vunpack.c.h.b16 %v69
  %v123 = vunpack.c.l.b16 %v70
  %v124 = vunpack.c.h.b16 %v70
  %v125 = vpack.c.b16 %v95, %v93
  %v126 = vpack.c.b16 %v96, %v94
  %v127 = vpack.c.b16 %v99, %v97
  %v128 = vpack.c.b16 %v100, %v98
  %v129 = vpack.c.b16 %v103, %v101
  %v130 = vpack.c.b16 %v104, %v102
  %v131 = vpack.c.b16 %v107, %v105
  %v132 = vpack.c.b16 %v108, %v106
  %v133 = vpack.c.b16 %v111, %v109
  %v134 = vpack.c.b16 %v112, %v110
  %v135 = vpack.c.b16 %v115, %v113
  %v136 = vpack.c.b16 %v116, %v114
  %v137 = vpack.c.b16 %v119, %v117
  %v138 = vpack.c.b16 %v120, %v118
  %v139 = vpack.c.b16 %v123, %v121
  %v140 = vpack.c.b16 %v124, %v122
  %157 = vmatprep.subr.bf16.mxu0 %v126
  %158 = vmatpush1.bf16.msra.mxu0 %v125
  %159 = vmatprep.subr.bf16.mxu0 %v128
  %160 = vmatpush1.bf16.msra.mxu0 %v127
  %161 = vmatprep.subr.bf16.mxu0 %v130
  %162 = vmatpush1.bf16.msra.mxu0 %v129
  %163 = vmatprep.subr.bf16.mxu0 %v132
  %164 = vmatpush1.bf16.msra.mxu0 %v131
  %165 = vmatprep.subr.bf16.mxu0 %v134
  %166 = vmatpush1.bf16.msra.mxu0 %v133
  %167 = vmatprep.subr.bf16.mxu0 %v136
  %168 = vmatpush1.bf16.msra.mxu0 %v135
  %169 = vmatprep.subr.bf16.mxu0 %v138
  %170 = vmatpush1.bf16.msra.mxu0 %v137
  %171 = vmatprep.subr.bf16.mxu0 %v140
  %172 = vmatpush1.bf16.msra.mxu0 %v139
  %173 = vmatprep.subr.bf16.mxu0 0
  %174 = vmatpush1.bf16.msra.mxu0 0
  %175 = vmatprep.subr.bf16.mxu0 0
  %176 = vmatpush1.bf16.msra.mxu0 0
  %177 = vmatprep.subr.bf16.mxu0 0
  %178 = vmatpush1.bf16.msra.mxu0 0
  %179 = vmatprep.subr.bf16.mxu0 0
  %180 = vmatpush1.bf16.msra.mxu0 0
  %181 = vmatprep.subr.bf16.mxu0 0
  %182 = vmatpush1.bf16.msra.mxu0 0
  %183 = vmatprep.subr.bf16.mxu0 0
  %184 = vmatpush1.bf16.msra.mxu0 0
  %185 = vmatprep.subr.bf16.mxu0 0
  %186 = vmatpush1.bf16.msra.mxu0 0
  %187 = vmatprep.subr.bf16.mxu0 0
  %188 = vmatpush1.bf16.msra.mxu0 0
  %189 = vmatprep.mubr.bf16.mxu0 0
  %190 = vmatmul.mubr.bf16.gmra.mrb[0].mxu0 %v75
  %v191 = vpop.f32.mrb[0].mxu0
  %v192 = vadd.f32 0.0, %v191
  %v193 = vpop.f32.mrb[0].mxu0
  %v194 = vadd.f32 0.0, %v193
  %v195 = vpop.f32.mrb[0].mxu0
  %v196 = vadd.f32 0.0, %v195
  %v197 = vpop.f32.mrb[0].mxu0
  %v198 = vadd.f32 0.0, %v197
  %199 = vdwg.mxu0
  %v200 = vpack.c.bf16 %v196, %v192
  %v201 = vpack.c.bf16 %v198, %v194
  %v204 = vunpack.c.l.b16 %v200
  %v205 = vunpack.c.l.b16 %v201
  %v206 = vunpack.c.h.b16 %v200
  %v207 = vunpack.c.h.b16 %v201
  %v208 = vpack.c.b16 %v205, %v204
  %v209 = vpack.c.b16 %v207, %v206
  %212 = vst [vmem:[%s49] sm:$0xff] %v208
  %213 = vst [vmem:[%s49 + $0x8] sm:$0xff] %v209
  %p214 = scmp.eq.s32.totalorder 0, 0
  // Predicated region
  $region10: #{predictor_forward.2} parent=0 // pred_check
    %p215 = pneg %p214
  $region11: #{predictor_forward.2} parent=0 // pred_check_branch
    %217 = sbr.rel (%p215) target = $region13
  $region12: #{predictor_forward.2} parent=0 // pred_region
    %218 = vst [vmem:[%s3] sm:$0xff] 0.0
    %219 = vst [vmem:[%s3 + $0x8] sm:$0xff] 0.0
    %220 = vst [vmem:[%s4] sm:$0xff] 0.0
    %221 = vst [vmem:[%s4 + $0x8] sm:$0xff] 0.0
  $region13: #{predictor_forward.2} parent=0 // pred_fallthru
    _
  %v222 = vld [vmem:[%s3] sm:$0xff]
  %v223 = vld [vmem:[%s3 + $0x8] sm:$0xff]
  %v224 = vadd.f32 %v192, %v196
  %v225 = vrot.slane %v224, 4
  %v226 = vadd.f32 %v224, %v225
  %v227 = vrot.slane %v226, 2
  %v228 = vadd.f32 %v226, %v227
  %v229 = vrot.slane %v228, 1
  %v230 = vadd.f32 %v228, %v229
  %v231 = vadd.f32 %v194, %v198
  %v232 = vrot.slane %v231, 4
  %v233 = vadd.f32 %v231, %v232
  %v234 = vrot.slane %v233, 2
  %v235 = vadd.f32 %v233, %v234
  %v236 = vrot.slane %v235, 1
  %v237 = vadd.f32 %v235, %v236
  %v238 = vadd.f32 %v222, %v230
  %v239 = vadd.f32 %v223, %v237
  %240 = vst [vmem:[%s3] sm:$0xff] %v238
  %241 = vst [vmem:[%s3 + $0x8] sm:$0xff] %v239
  %v242 = vld [vmem:[%s4] sm:$0xff]
  %v243 = vld [vmem:[%s4 + $0x8] sm:$0xff]
  %v244 = vmul.f32 %v192, %v192
  %v245 = vmul.f32 %v194, %v194
  %v246 = vmul.f32 %v196, %v196
  %v247 = vmul.f32 %v198, %v198
  %v248 = vadd.f32 %v244, %v246
  %v249 = vrot.slane %v248, 4
  %v250 = vadd.f32 %v248, %v249
  %v251 = vrot.slane %v250, 2
  %v252 = vadd.f32 %v250, %v251
  %v253 = vrot.slane %v252, 1
  %v254 = vadd.f32 %v252, %v253
  %v255 = vadd.f32 %v245, %v247
  %v256 = vrot.slane %v255, 4
  %v257 = vadd.f32 %v255, %v256
  %v258 = vrot.slane %v257, 2
  %v259 = vadd.f32 %v257, %v258
  %v260 = vrot.slane %v259, 1
  %v261 = vadd.f32 %v259, %v260
  %v262 = vadd.f32 %v242, %v254
  %v263 = vadd.f32 %v243, %v261
  %264 = vst [vmem:[%s4] sm:$0xff] %v262
  %265 = vst [vmem:[%s4 + $0x8] sm:$0xff] %v263
  %s266 = sadd.s32 0, 0
  %s267 = smul.u32 2, %s266
  %p268 = scmp.lt.s32.totalorder %s267, 1
  %s269 = scalar_select %p268, %s267, 1
  %s270 = smul.addr %s269, 2
  %s271 = smul.addr %s270, 4
  %s272 = scalar_lea.vmem %s2, %s271
  // Predicated region
  $region14: #{predictor_forward.2} parent=0 // pred_check
    _
  $region15: #{predictor_forward.2} parent=0 // pred_check_branch
    %274 = sbr.rel (0) target = $region17
  $region16: #{predictor_forward.2} parent=0 // pred_region
    %s275 = sadd.s32 0, 0
    %s276 = smul.u32 2, %s275
  $region17: #{predictor_forward.2} parent=0 // pred_fallthru
    _
  // Predicated region
  $region18: #{predictor_forward.2} parent=0 // pred_check
    _
  $region19: #{predictor_forward.2} parent=0 // pred_check_branch
    %278 = sbr.rel (0) target = $region21
  $region20: #{predictor_forward.2} parent=0 // pred_region
    _
  $region21: #{predictor_forward.2} parent=0 // pred_fallthru
    _
  // Predicated region
  $region22: #{predictor_forward.2} parent=0 // pred_check
    _
  $region23: #{predictor_forward.2} parent=0 // pred_check_branch
    %280 = sbr.rel (0) target = $region25
  $region24: #{predictor_forward.2} parent=0 // pred_region
    _
  $region25: #{predictor_forward.2} parent=0 // pred_fallthru
    _
  // Predicated region
  $region26: #{predictor_forward.2} parent=0 // pred_check
    _
  $region27: #{predictor_forward.2} parent=0 // pred_check_branch
    %282 = sbr.rel (0) target = $region29
  $region28: #{predictor_forward.2} parent=0 // pred_region
    %s283 = sadd.s32 0, 0
    %s284 = smul.u32 2, %s283
    %p285 = scmp.lt.s32.totalorder %s284, 1
    %s286 = scalar_select %p285, %s284, 1
    %s287 = smul.addr %s286, 2
    %s288 = smul.addr %s287, 4
    %s289 = scalar_lea.vmem %s2, %s288
  $region29: #{predictor_forward.2} parent=0 // pred_fallthru
    _
  // Predicated region
  $region30: #{predictor_forward.2} parent=0 // pred_check
    _
  $region31: #{predictor_forward.2} parent=0 // pred_check_branch
    %291 = sbr.rel (0) target = $region33
  $region32: #{predictor_forward.2} parent=0 // pred_region
    _
  $region33: #{predictor_forward.2} parent=0 // pred_fallthru
    _
  // Predicated region
  $region34: #{predictor_forward.2} parent=0 // pred_check
    _
  $region35: #{predictor_forward.2} parent=0 // pred_check_branch
    %293 = sbr.rel (0) target = $region37
  $region36: #{predictor_forward.2} parent=0 // pred_region
    _
  $region37: #{predictor_forward.2} parent=0 // pred_fallthru
    _

// kernel: predictor_forward.3
$region0: #{predictor_forward.3}
  #allocation0 [shape = 'u32[]', space=smem, size = 0x4, offset = 0x4, fixed_abs, tag = 'smem constant byte address 0x4 - core index']
  #allocation1 [shape = 'u32[144,128]{1,0:T(1,128)}', space=vmem, size = 0x12000, scoped, tag = 'internal scratch']
  %s0 = inlined_call_operand.vmem [shape: bf16[16,256], index: 0, kind: input, shape index: {}]
  %s1 = inlined_call_operand.vmem [shape: f32[1,256], index: 1, kind: input, shape index: {}]
  %s2 = inlined_call_operand.vmem [shape: f32[1,256], index: 2, kind: input, shape index: {}]
  %s3 = inlined_call_operand.vmem [shape: bf16[256,128], index: 3, kind: input, shape index: {}]
  %s4 = inlined_call_operand.vmem [shape: f32[1,128], index: 4, kind: input, shape index: {}]
  %s5 = inlined_call_operand.hbm [shape: f32[16,128], index: 5, kind: output, shape index: {}]
  %s6 = sld [smem:[#allocation0]]
  $region30: #{predictor_forward.3} parent=0
    _
  %s8 = ssub.s32 1, %s6
  %s9 = scalar_select 0, %s8, %s6
  $region1: #{predictor_forward.3} parent=0
    #allocation2 [shape = 'u8[8192]{0}', space=vmem, size = 0x2000, scoped, tag = 'output window, operand 0, single buffered']
    #allocation3 [shape = 's32[1]{0}', space=sflag, size = 0x4, scoped, tag = 'scoped memory for predictor_forward.3']
    %10 = vsyncpa [#allocation3], 0
    // Predicated region
    $region2: #{predictor_forward.3} parent=1 // pred_check
      _
    $region3: #{predictor_forward.3} parent=1 // pred_check_branch
      %12 = sbr.rel (0) target = $region5
    $region4: #{predictor_forward.3} parent=1 // pred_region
      _
    $region5: #{predictor_forward.3} parent=1 // pred_fallthru
      _
    // Predicated region
    $region6: #{predictor_forward.3} parent=1 // pred_check
      _
    $region7: #{predictor_forward.3} parent=1 // pred_check_branch
      %14 = sbr.rel (0) target = $region9
    $region8: #{predictor_forward.3} parent=1 // pred_region
      _
    $region9: #{predictor_forward.3} parent=1 // pred_fallthru
      _
    // Predicated region
    $region10: #{predictor_forward.3} parent=1 // pred_check
      _
    $region11: #{predictor_forward.3} parent=1 // pred_check_branch
      %16 = sbr.rel (0) target = $region13
    $region12: #{predictor_forward.3} parent=1 // pred_region
      _
    $region13: #{predictor_forward.3} parent=1 // pred_fallthru
      _
    // Predicated region
    $region14: #{predictor_forward.3} parent=1 // pred_check
      _
    $region15: #{predictor_forward.3} parent=1 // pred_check_branch
      %18 = sbr.rel (0) target = $region17
    $region16: #{predictor_forward.3} parent=1 // pred_region
      _
    $region17: #{predictor_forward.3} parent=1 // pred_fallthru
      _
    // Predicated region
    $region18: #{predictor_forward.3} parent=1 // pred_check
      _
    $region19: #{predictor_forward.3} parent=1 // pred_check_branch
      %20 = sbr.rel (0) target = $region21
    $region20: #{predictor_forward.3} parent=1 // pred_region
      _
    $region21: #{predictor_forward.3} parent=1 // pred_fallthru
      _
    %v22 = vld [vmem:[%s0] sm:$0xff]
    %v23 = vld [vmem:[%s0 + $0x8] sm:$0xff]
    %v24 = vunpack.c.l.bf16 %v22
    %v25 = vunpack.c.h.bf16 %v22
    %v26 = vunpack.c.l.bf16 %v23
    %v27 = vunpack.c.h.bf16 %v23
    %v28 = vld [vmem:[%s1] sm:$0x3]
    %v30 = vlaneseq
    %v31 = vshrl.u32 %v30, 7
    %v32 = vsub.s32 0, %v31
    %v33 = vrot.slane %v28, %v32
    %v34 = vlaneseq
    %v35 = vshrl.u32 %v34, 7
    %v36 = vsub.s32 1, %v35
    %v37 = vrot.slane %v28, %v36
    %v40 = vmul.f32 %v24, %v33
    %v41 = vmul.f32 %v25, %v37
    %v42 = vmul.f32 %v26, %v33
    %v43 = vmul.f32 %v27, %v37
    %v44 = vld [vmem:[%s2] sm:$0x3]
    %v46 = vlaneseq
    %v47 = vshrl.u32 %v46, 7
    %v48 = vsub.s32 0, %v47
    %v49 = vrot.slane %v44, %v48
    %v50 = vlaneseq
    %v51 = vshrl.u32 %v50, 7
    %v52 = vsub.s32 1, %v51
    %v53 = vrot.slane %v44, %v52
    %v56 = vadd.f32 %v40, %v49
    %v57 = vadd.f32 %v41, %v53
    %v58 = vadd.f32 %v42, %v49
    %v59 = vadd.f32 %v43, %v53
    %v60 = vmax.f32 %v56, 0.0
    %v61 = vmax.f32 %v57, 0.0
    %v62 = vmax.f32 %v58, 0.0
    %v63 = vmax.f32 %v59, 0.0
    %v64 = vpack.c.bf16 %v62, %v60
    %v65 = vpack.c.bf16 %v63, %v61
    %v66 = vld [vmem:[%s3] sm:$0xf]
    %v67 = vld [vmem:[%s3 + $0x4] sm:$0xf]
    %v68 = vld [vmem:[%s3 + $0x8] sm:$0xf]
    %v69 = vld [vmem:[%s3 + $0xc] sm:$0xf]
    %v70 = vld [vmem:[%s3 + $0x10] sm:$0xf]
    %v71 = vld [vmem:[%s3 + $0x14] sm:$0xf]
    %v72 = vld [vmem:[%s3 + $0x18] sm:$0xf]
    %v73 = vld [vmem:[%s3 + $0x1c] sm:$0xf]
    %v74 = vld [vmem:[%s3 + $0x20] sm:$0xf]
    %v75 = vld [vmem:[%s3 + $0x24] sm:$0xf]
    %v76 = vld [vmem:[%s3 + $0x28] sm:$0xf]
    %v77 = vld [vmem:[%s3 + $0x2c] sm:$0xf]
    %v78 = vld [vmem:[%s3 + $0x30] sm:$0xf]
    %v79 = vld [vmem:[%s3 + $0x34] sm:$0xf]
    %v80 = vld [vmem:[%s3 + $0x38] sm:$0xf]
    %v81 = vld [vmem:[%s3 + $0x3c] sm:$0xf]
    %v82 = vld [vmem:[%s3 + $0x40] sm:$0xf]
    %v83 = vld [vmem:[%s3 + $0x44] sm:$0xf]
    %v84 = vld [vmem:[%s3 + $0x48] sm:$0xf]
    %v85 = vld [vmem:[%s3 + $0x4c] sm:$0xf]
    %v86 = vld [vmem:[%s3 + $0x50] sm:$0xf]
    %v87 = vld [vmem:[%s3 + $0x54] sm:$0xf]
    %v88 = vld [vmem:[%s3 + $0x58] sm:$0xf]
    %v89 = vld [vmem:[%s3 + $0x5c] sm:$0xf]
    %v90 = vld [vmem:[%s3 + $0x60] sm:$0xf]
    %v91 = vld [vmem:[%s3 + $0x64] sm:$0xf]
    %v92 = vld [vmem:[%s3 + $0x68] sm:$0xf]
    %v93 = vld [vmem:[%s3 + $0x6c] sm:$0xf]
    %v94 = vld [vmem:[%s3 + $0x70] sm:$0xf]
    %v95 = vld [vmem:[%s3 + $0x74] sm:$0xf]
    %v96 = vld [vmem:[%s3 + $0x78] sm:$0xf]
    %v97 = vld [vmem:[%s3 + $0x7c] sm:$0xf]
    %v98 = vld [vmem:[%s4] sm:$0x1]
    %v100 = vlaneseq
    %v101 = vshrl.u32 %v100, 7
    %v102 = vsub.s32 0, %v101
    %v103 = vrot.slane %v98, %v102
    %v137 = vunpack.c.l.b16 %v66
    %v138 = vunpack.c.l.b16 %v67
    %v139 = vunpack.c.l.b16 %v68
    %v140 = vunpack.c.l.b16 %v69
    %v141 = vunpack.c.l.b16 %v70
    %v142 = vunpack.c.l.b16 %v71
    %v143 = vunpack.c.l.b16 %v72
    %v144 = vunpack.c.l.b16 %v73
    %v145 = vunpack.c.l.b16 %v74
    %v146 = vunpack.c.l.b16 %v75
    %v147 = vunpack.c.l.b16 %v76
    %v148 = vunpack.c.l.b16 %v77
    %v149 = vunpack.c.l.b16 %v78
    %v150 = vunpack.c.l.b16 %v79
    %v151 = vunpack.c.l.b16 %v80
    %v152 = vunpack.c.l.b16 %v81
    %v153 = vunpack.c.l.b16 %v82
    %v154 = vunpack.c.l.b16 %v83
    %v155 = vunpack.c.l.b16 %v84
    %v156 = vunpack.c.l.b16 %v85
    %v157 = vunpack.c.l.b16 %v86
    %v158 = vunpack.c.l.b16 %v87
    %v159 = vunpack.c.l.b16 %v88
    %v160 = vunpack.c.l.b16 %v89
    %v161 = vunpack.c.l.b16 %v90
    %v162 = vunpack.c.l.b16 %v91
    %v163 = vunpack.c.l.b16 %v92
    %v164 = vunpack.c.l.b16 %v93
    %v165 = vunpack.c.l.b16 %v94
    %v166 = vunpack.c.l.b16 %v95
    %v167 = vunpack.c.l.b16 %v96
    %v168 = vunpack.c.l.b16 %v97
    %v169 = vpack.c.b16 %v138, %v137
    %v170 = vpack.c.b16 %v140, %v139
    %v171 = vpack.c.b16 %v142, %v141
    %v172 = vpack.c.b16 %v144, %v143
    %v173 = vpack.c.b16 %v146, %v145
    %v174 = vpack.c.b16 %v148, %v147
    %v175 = vpack.c.b16 %v150, %v149
    %v176 = vpack.c.b16 %v152, %v151
    %v177 = vpack.c.b16 %v154, %v153
    %v178 = vpack.c.b16 %v156, %v155
    %v179 = vpack.c.b16 %v158, %v157
    %v180 = vpack.c.b16 %v160, %v159
    %v181 = vpack.c.b16 %v162, %v161
    %v182 = vpack.c.b16 %v164, %v163
    %v183 = vpack.c.b16 %v166, %v165
    %v184 = vpack.c.b16 %v168, %v167
    %201 = vmatprep.subr.bf16.mxu0 0
    %202 = vmatpush1.bf16.msra.mxu0 %v169
    %203 = vmatprep.subr.bf16.mxu0 0
    %204 = vmatpush1.bf16.msra.mxu0 %v170
    %205 = vmatprep.subr.bf16.mxu0 0
    %206 = vmatpush1.bf16.msra.mxu0 %v171
    %207 = vmatprep.subr.bf16.mxu0 0
    %208 = vmatpush1.bf16.msra.mxu0 %v172
    %209 = vmatprep.subr.bf16.mxu0 0
    %210 = vmatpush1.bf16.msra.mxu0 %v173
    %211 = vmatprep.subr.bf16.mxu0 0
    %212 = vmatpush1.bf16.msra.mxu0 %v174
    %213 = vmatprep.subr.bf16.mxu0 0
    %214 = vmatpush1.bf16.msra.mxu0 %v175
    %215 = vmatprep.subr.bf16.mxu0 0
    %216 = vmatpush1.bf16.msra.mxu0 %v176
    %217 = vmatprep.subr.bf16.mxu0 0
    %218 = vmatpush1.bf16.msra.mxu0 %v177
    %219 = vmatprep.subr.bf16.mxu0 0
    %220 = vmatpush1.bf16.msra.mxu0 %v178
    %221 = vmatprep.subr.bf16.mxu0 0
    %222 = vmatpush1.bf16.msra.mxu0 %v179
    %223 = vmatprep.subr.bf16.mxu0 0
    %224 = vmatpush1.bf16.msra.mxu0 %v180
    %225 = vmatprep.subr.bf16.mxu0 0
    %226 = vmatpush1.bf16.msra.mxu0 %v181
    %227 = vmatprep.subr.bf16.mxu0 0
    %228 = vmatpush1.bf16.msra.mxu0 %v182
    %229 = vmatprep.subr.bf16.mxu0 0
    %230 = vmatpush1.bf16.msra.mxu0 %v183
    %231 = vmatprep.subr.bf16.mxu0 0
    %232 = vmatpush1.bf16.msra.mxu0 %v184
    %233 = vmatprep.mubr.bf16.mxu0 %v65
    %234 = vmatmul.mubr.bf16.gmra.mrb[0].mxu0 %v64
    %v235 = vpop.f32.mrb[0].mxu0
    %v236 = vadd.f32 %v103, %v235
    %v237 = vpop.f32.mrb[0].mxu0
    %v238 = vpop.f32.mrb[0].mxu0
    %v239 = vadd.f32 %v103, %v238
    %v240 = vpop.f32.mrb[0].mxu0
    %241 = vdwg.mxu0
    %242 = vst [vmem:[#allocation2] sm:$0xff] %v236
    %243 = vst [vmem:[#allocation2 + $0x8] sm:$0xff] %v239
    // Predicated region
    $region22: #{predictor_forward.3} parent=1 // pred_check
      _
    $region23: #{predictor_forward.3} parent=1 // pred_check_branch
      %245 = sbr.rel (0) target = $region25
    $region24: #{predictor_forward.3} parent=1 // pred_region
      %s247 = ssub.s32 256, 256
      %248 = vsyncadd [#allocation3], %s247
      %s249 = sshll.u32 [#allocation2], 4
      %s250 = int_to_ptr.vmem [resolvable:$true] %s249
      %255 = dma.vmem_to_hbm [thread:$0]  %s250, 256, %s5, [#allocation3], 128, 128, 8
    $region25: #{predictor_forward.3} parent=1 // pred_fallthru
      _
    // Predicated region
    $region26: #{predictor_forward.3} parent=1 // pred_check
      _
    $region27: #{predictor_forward.3} parent=1 // pred_check_branch
      %257 = sbr.rel (0) target = $region29
    $region28: #{predictor_forward.3} parent=1 // pred_region
      %258 = dma.done [#allocation3], 256
    $region29: #{predictor_forward.3} parent=1 // pred_fallthru
      _
    %259 = vsyncpa [#allocation3], 1

</llo_original>
